<compile_context>
chip_gen: v5e
topology: v5e:2x2
jax: 0.10.0
libtpu: 0.0.40
codegen_flags: <defaults>
</compile_context>

<pallas_src>
import jax
import jax.numpy as jnp
from jax.experimental import pallas as pl
from jax.experimental.pallas import tpu as pltpu


def _qnet_fused_kernel(scalars_ref, agg_ref, node_ref, w_ref, out_ref):
    """Fused critic+actor head: scale -> relu -> weighted lane-reduce.

    scalars_ref: SMEM f32[6] = [beta2, beta3, fc1_bias, theta2, theta3, fc2_bias]
    agg_ref    : VMEM [TB, D]  (f32 or bf16)
    node_ref   : VMEM [TB, D]  (f32 or bf16)
    w_ref      : VMEM f32[4, D] rows = [w_agg_critic, w_node_critic,
                                        w_agg_actor,  w_node_actor]   (lane-major)
    out_ref    : VMEM f32[TB, 2]  col 0 = critic, col 1 = actor
    """
    for h in range(2):  # 0 = critic, 1 = actor (static unroll)
        s_agg = scalars_ref[3 * h + 0]
        s_node = scalars_ref[3 * h + 1]
        bias = scalars_ref[3 * h + 2]

        # Re-read the input tiles per head (VMEM re-reads are cheap: 3 vld/cycle)
        # and fuse the relu so each [TB, D] value has a short live range.
        a = jnp.maximum(s_agg * agg_ref[...].astype(jnp.float32), 0.0)
        n = jnp.maximum(s_node * node_ref[...].astype(jnp.float32), 0.0)

        w_agg = w_ref[2 * h : 2 * h + 1, :]       # [1, D] lane-major weight row
        w_node = w_ref[2 * h + 1 : 2 * h + 2, :]

        # VPU mul + XLU lane reduce (keeps the N=1 matvec off the MXU).
        acc = jnp.sum(a * w_agg + n * w_node, axis=-1, keepdims=True) + bias  # [TB, 1]
        out_ref[:, h : h + 1] = acc               # direct per-head store, no concat


def _weight_norm_effective(v, g):
    # PyTorch weight_norm(dim=0): w = g * v / ||v|| with the norm over dims != 0.
    # v: [1, 2D]; g: [1, 1].  (No epsilon, matching PyTorch.)
    norm = jnp.sqrt(jnp.sum(v * v, axis=1, keepdims=True))
    return g * v / norm


def prepare_qnet_params(params, embed_dim):
    """O(D) parameter prep (weight-norm + packing). Hoist when params are static."""
    D = embed_dim
    w_c = _weight_norm_effective(params["fc1_v"], params["fc1_g"])[0]  # [2D]
    w_a = _weight_norm_effective(params["fc2_v"], params["fc2_g"])[0]  # [2D]
    # cat order in the reference forward is (agg, node): first D weight columns
    # multiply agg, last D multiply node.
    w_rows = jnp.stack([w_c[:D], w_c[D:], w_a[:D], w_a[D:]], axis=0)   # [4, D]
    w_rows = w_rows.astype(jnp.float32)
    scalars = jnp.stack([
        params["beta2"][0], params["beta3"][0], params["fc1_b"][0],
        params["theta2"][0], params["theta3"][0], params["fc2_b"][0],
    ]).astype(jnp.float32)                                             # [6]
    return scalars, w_rows


def _pick_batch_tile(B, block_b):
    """Batch tile: whole batch if small; otherwise choose a large tile that
    still yields >= 2 grid steps so a 2-TC part (v7x) can shard the batch axis."""
    if B <= 512:
        return B
    tb = min(block_b, -(-B // 2))       # cdiv(B, 2): at least 2 grid steps
    tb = ((tb + 7) // 8) * 8            # sublane-align
    return min(tb, B)


def qnet_forward_fused(params, node_embed, agg_embed, *, block_b=4096):
    """Runs BOTH heads in one Pallas call. Returns (critic [B,1], actor [B,1])."""
    B, D = node_embed.shape
    assert agg_embed.shape == (B, D)

    scalars, w_rows = prepare_qnet_params(params, D)

    tb = _pick_batch_tile(B, block_b)
    grid = (pl.cdiv(B, tb),)
    # Trailing partial batch block is safe: the reduce is per-row (lane axis),
    # so padded garbage rows cannot contaminate valid rows; Pallas clips the
    # out-of-bounds output region.

    # VMEM budget: [tb, D] f32 tiles are lane-padded to multiples of 128 lanes;
    # 2 inputs double-buffered + double-buffered [tb, 2->128] output + slack.
    # Set the limit explicitly so big tiles compile on v5e's 16 MiB scoped
    # default, capped under v7x's 64 MiB physical VMEM.
    lane_pad = ((D + 127) // 128) * 128
    vmem_need = int(1.25 * (2 * 2 * tb * lane_pad * 4 + 2 * tb * 128 * 4)) + (1 << 20)
    vmem_limit = int(min(64 << 20, max(16 << 20, vmem_need)))

    in_itemsize = jnp.dtype(node_embed.dtype).itemsize
    cost = pl.CostEstimate(
        flops=8 * B * D,  # 2 heads x (scale + relu-cmp + weight-mul + add) per element
        transcendentals=0,
        bytes_accessed=2 * B * D * in_itemsize + B * 2 * 4 + 4 * D * 4 + 6 * 4,
    )

    out = pl.pallas_call(
        _qnet_fused_kernel,
        out_shape=jax.ShapeDtypeStruct((B, 2), jnp.float32),
        grid=grid,
        in_specs=[
            pl.BlockSpec(memory_space=pltpu.SMEM),          # scalars (whole array)
            pl.BlockSpec((tb, D), lambda i: (i, 0)),        # agg_embed tile
            pl.BlockSpec((tb, D), lambda i: (i, 0)),        # node_embed tile
            pl.BlockSpec((4, D), lambda i: (0, 0)),         # packed weight rows
        ],
        out_specs=pl.BlockSpec((tb, 2), lambda i: (i, 0)),
        compiler_params=pltpu.CompilerParams(
            # "parallel" lets the runtime shard the batch axis across TCs where
            # supported; the tile choice above guarantees >= 2 grid steps for
            # larger B so there is actually work to shard on v7x.
            dimension_semantics=("parallel",),
            vmem_limit_bytes=vmem_limit,
        ),
        cost_estimate=cost,
    )(scalars, agg_embed, node_embed, w_rows)

    return out[:, 0:1], out[:, 1:2]


def qnet_forward(params, node_embed, agg_embed, role="critic"):
    """Single-role convenience wrapper matching the PyTorch forward signature."""
    critic, actor = qnet_forward_fused(params, node_embed, agg_embed)
    if role == "critic":
        return critic
    elif role == "actor":
        return actor
    raise ValueError(role)


def init_params(key, embed_dim=64):
    """Deterministic synthetic init matching the PyTorch __init__ shapes."""
    D2 = embed_dim * 2
    ks = jax.random.split(key, 10)
    # torch.rand -> uniform(0, 1)
    beta1 = jax.random.uniform(ks[0], (D2, 1), jnp.float32)
    beta2 = jax.random.uniform(ks[1], (1,), jnp.float32)
    beta3 = jax.random.uniform(ks[2], (1,), jnp.float32)
    theta1 = jax.random.uniform(ks[3], (D2, 1), jnp.float32)
    theta2 = jax.random.uniform(ks[4], (1,), jnp.float32)
    theta3 = jax.random.uniform(ks[5], (1,), jnp.float32)

    # xavier_uniform_ for Linear(2D, 1): limit = sqrt(6 / (fan_in + fan_out))
    limit = (6.0 / (D2 + 1)) ** 0.5
    fc1_w = jax.random.uniform(ks[6], (1, D2), jnp.float32, -limit, limit)
    fc2_w = jax.random.uniform(ks[7], (1, D2), jnp.float32, -limit, limit)
    # weight_norm init: v = w, g = ||w|| (so the effective weight == w at init)
    fc1_g = jnp.sqrt(jnp.sum(fc1_w * fc1_w, axis=1, keepdims=True))
    fc2_g = jnp.sqrt(jnp.sum(fc2_w * fc2_w, axis=1, keepdims=True))
    # Linear bias default init: uniform(-1/sqrt(fan_in), 1/sqrt(fan_in))
    bl = 1.0 / (D2 ** 0.5)
    fc1_b = jax.random.uniform(ks[8], (1,), jnp.float32, -bl, bl)
    fc2_b = jax.random.uniform(ks[9], (1,), jnp.float32, -bl, bl)

    return {
        "beta1": beta1, "beta2": beta2, "beta3": beta3,
        "theta1": theta1, "theta2": theta2, "theta3": theta3,
        "fc1_v": fc1_w, "fc1_g": fc1_g, "fc1_b": fc1_b,
        "fc2_v": fc2_w, "fc2_g": fc2_g, "fc2_b": fc2_b,
    }


def _reference_forward(params, node_embed, agg_embed, role="critic"):
    """Pure-JAX reference mirroring the PyTorch forward exactly."""
    if role == "critic":
        s_a, s_n = params["beta2"], params["beta3"]
        w = _weight_norm_effective(params["fc1_v"], params["fc1_g"])
        b = params["fc1_b"]
    else:
        s_a, s_n = params["theta2"], params["theta3"]
        w = _weight_norm_effective(params["fc2_v"], params["fc2_g"])
        b = params["fc2_b"]
    combined = jnp.concatenate([s_a * agg_embed, s_n * node_embed], axis=1)
    return jnp.maximum(combined, 0.0) @ w.T + b


if __name__ == "__main__":
    embed_dim = 64
    batch = 8

    key = jax.random.PRNGKey(0)
    k_params, k_node, k_agg = jax.random.split(key, 3)

    params = init_params(k_params, embed_dim)
    node_embed = jax.random.normal(k_node, (batch, embed_dim), jnp.float32)
    agg_embed = jax.random.normal(k_agg, (batch, embed_dim), jnp.float32)

    # --- main demo: jitted so the O(D) param prep + output slicing fuse ---
    fused = jax.jit(qnet_forward_fused)
    q_critic, q_actor = fused(params, node_embed, agg_embed)
    jax.block_until_ready((q_critic, q_actor))

    ref_critic = _reference_forward(params, node_embed, agg_embed, role="critic")
    ref_actor = _reference_forward(params, node_embed, agg_embed, role="actor")

    assert q_critic.shape == (batch, 1) and q_actor.shape == (batch, 1)
    assert jnp.allclose(q_critic, ref_critic, atol=1e-5, rtol=1e-5)
    assert jnp.allclose(q_actor, ref_actor, atol=1e-5, rtol=1e-5)

    # Role-based wrapper (same fused pallas_call underneath).
    assert jnp.allclose(qnet_forward(params, node_embed, agg_embed, "critic"),
                        ref_critic, atol=1e-5, rtol=1e-5)

    # --- multi-step grid + trailing partial batch block (B not multiple of tb) ---
    B2 = 600
    k_n2, k_a2 = jax.random.split(jax.random.PRNGKey(1), 2)
    node2 = jax.random.normal(k_n2, (B2, embed_dim), jnp.float32)
    agg2 = jax.random.normal(k_a2, (B2, embed_dim), jnp.float32)
    qc2, qa2 = qnet_forward_fused(params, node2, agg2, block_b=128)  # grid=(5,), partial tail
    jax.block_until_ready((qc2, qa2))
    assert jnp.allclose(qc2, _reference_forward(params, node2, agg2, "critic"),
                        atol=1e-5, rtol=1e-5)
    assert jnp.allclose(qa2, _reference_forward(params, node2, agg2, "actor"),
                        atol=1e-5, rtol=1e-5)

    # --- bf16 embeddings (upcast in-kernel, f32 accumulate) ---
    node_bf = node_embed.astype(jnp.bfloat16)
    agg_bf = agg_embed.astype(jnp.bfloat16)
    qc_bf, qa_bf = qnet_forward_fused(params, node_bf, agg_bf)
    jax.block_until_ready((qc_bf, qa_bf))
    ref_c_bf = _reference_forward(params, node_bf.astype(jnp.float32),
                                  agg_bf.astype(jnp.float32), "critic")
    ref_a_bf = _reference_forward(params, node_bf.astype(jnp.float32),
                                  agg_bf.astype(jnp.float32), "actor")
    assert jnp.allclose(qc_bf, ref_c_bf, atol=1e-4, rtol=1e-4)
    assert jnp.allclose(qa_bf, ref_a_bf, atol=1e-4, rtol=1e-4)

    print("KERNEL_OK")
</pallas_src>

<mosaic_0001>
module attributes {stable_mosaic.version = 11 : i64} {
  func.func @_qnet_fused_kernel(%arg0: i32, %arg1: memref<6xf32, #tpu.memory_space<smem>>, %arg2: memref<8x64xf32, #tpu.memory_space<vmem>>, %arg3: memref<8x64xf32, #tpu.memory_space<vmem>>, %arg4: memref<4x64xf32, #tpu.memory_space<vmem>>, %arg5: memref<8x2xf32, #tpu.memory_space<vmem>>) attributes {dimension_semantics = [#tpu.dimension_semantics<parallel>], iteration_bounds = array<i64: 1>, scalar_prefetch = 0 : i64, scratch_operands = 0 : i64, tpu.core_type = #tpu.core_type<tc>, window_params = [{transform_indices = @transform_0, window_bounds = array<i64: 6>}, {transform_indices = @transform_1, window_bounds = array<i64: 8, 64>}, {transform_indices = @transform_2, window_bounds = array<i64: 8, 64>}, {pipeline_mode = #tpu.pipeline_mode<synchronous>, transform_indices = @transform_3, window_bounds = array<i64: 4, 64>}, {transform_indices = @transform_4, window_bounds = array<i64: 8, 2>}]} {
    %c0 = arith.constant 0 : index
    %0 = memref.load %arg1[%c0] : memref<6xf32, #tpu.memory_space<smem>>
    %c1 = arith.constant 1 : index
    %1 = memref.load %arg1[%c1] : memref<6xf32, #tpu.memory_space<smem>>
    %c2 = arith.constant 2 : index
    %2 = memref.load %arg1[%c2] : memref<6xf32, #tpu.memory_space<smem>>
    %c0_0 = arith.constant 0 : index
    %c0_1 = arith.constant 0 : index
    %3 = vector.load %arg2[%c0_0, %c0_1] : memref<8x64xf32, #tpu.memory_space<vmem>>, vector<8x64xf32>
    %4 = vector.broadcast %0 : f32 to vector<8x64xf32>
    %5 = arith.mulf %4, %3 : vector<8x64xf32>
    %cst = arith.constant 0.000000e+00 : f32
    %6 = vector.broadcast %cst : f32 to vector<8x64xf32>
    %7 = arith.maximumf %5, %6 : vector<8x64xf32>
    %c0_2 = arith.constant 0 : index
    %c0_3 = arith.constant 0 : index
    %8 = vector.load %arg3[%c0_2, %c0_3] : memref<8x64xf32, #tpu.memory_space<vmem>>, vector<8x64xf32>
    %9 = vector.broadcast %1 : f32 to vector<8x64xf32>
    %10 = arith.mulf %9, %8 : vector<8x64xf32>
    %cst_4 = arith.constant 0.000000e+00 : f32
    %11 = vector.broadcast %cst_4 : f32 to vector<8x64xf32>
    %12 = arith.maximumf %10, %11 : vector<8x64xf32>
    %c0_5 = arith.constant 0 : index
    %c0_6 = arith.constant 0 : index
    %13 = vector.load %arg4[%c0_5, %c0_6] : memref<4x64xf32, #tpu.memory_space<vmem>>, vector<1x64xf32>
    %c1_7 = arith.constant 1 : index
    %c0_8 = arith.constant 0 : index
    %14 = vector.load %arg4[%c1_7, %c0_8] : memref<4x64xf32, #tpu.memory_space<vmem>>, vector<1x64xf32>
    %15 = vector.broadcast %13 : vector<1x64xf32> to vector<8x64xf32>
    %16 = arith.mulf %7, %15 : vector<8x64xf32>
    %17 = vector.broadcast %14 : vector<1x64xf32> to vector<8x64xf32>
    %18 = arith.mulf %12, %17 : vector<8x64xf32>
    %19 = arith.addf %16, %18 : vector<8x64xf32>
    %cst_9 = arith.constant dense<0.000000e+00> : vector<8xf32>
    %20 = vector.multi_reduction <add>, %19, %cst_9 [1] : vector<8x64xf32> to vector<8xf32>
    %21 = vector.shape_cast %20 : vector<8xf32> to vector<8x1xf32>
    %22 = vector.broadcast %2 : f32 to vector<8x1xf32>
    %23 = arith.addf %21, %22 : vector<8x1xf32>
    %c0_10 = arith.constant 0 : index
    %c0_11 = arith.constant 0 : index
    %24 = vector.load %arg5[%c0_10, %c0_11] : memref<8x2xf32, #tpu.memory_space<vmem>>, vector<8x1xf32>
    tpu.vector_store %arg5[%c0_10, %c0_11], %23 {strides = array<i32>} : memref<8x2xf32, #tpu.memory_space<vmem>>, vector<8x1xf32>,
    %c3 = arith.constant 3 : index
    %25 = memref.load %arg1[%c3] : memref<6xf32, #tpu.memory_space<smem>>
    %c4 = arith.constant 4 : index
    %26 = memref.load %arg1[%c4] : memref<6xf32, #tpu.memory_space<smem>>
    %c5 = arith.constant 5 : index
    %27 = memref.load %arg1[%c5] : memref<6xf32, #tpu.memory_space<smem>>
    %c0_12 = arith.constant 0 : index
    %c0_13 = arith.constant 0 : index
    %28 = vector.load %arg2[%c0_12, %c0_13] : memref<8x64xf32, #tpu.memory_space<vmem>>, vector<8x64xf32>
    %29 = vector.broadcast %25 : f32 to vector<8x64xf32>
    %30 = arith.mulf %29, %28 : vector<8x64xf32>
    %cst_14 = arith.constant 0.000000e+00 : f32
    %31 = vector.broadcast %cst_14 : f32 to vector<8x64xf32>
    %32 = arith.maximumf %30, %31 : vector<8x64xf32>
    %c0_15 = arith.constant 0 : index
    %c0_16 = arith.constant 0 : index
    %33 = vector.load %arg3[%c0_15, %c0_16] : memref<8x64xf32, #tpu.memory_space<vmem>>, vector<8x64xf32>
    %34 = vector.broadcast %26 : f32 to vector<8x64xf32>
    %35 = arith.mulf %34, %33 : vector<8x64xf32>
    %cst_17 = arith.constant 0.000000e+00 : f32
    %36 = vector.broadcast %cst_17 : f32 to vector<8x64xf32>
    %37 = arith.maximumf %35, %36 : vector<8x64xf32>
    %c2_18 = arith.constant 2 : index
    %c0_19 = arith.constant 0 : index
    %38 = vector.load %arg4[%c2_18, %c0_19] : memref<4x64xf32, #tpu.memory_space<vmem>>, vector<1x64xf32>
    %c3_20 = arith.constant 3 : index
    %c0_21 = arith.constant 0 : index
    %39 = vector.load %arg4[%c3_20, %c0_21] : memref<4x64xf32, #tpu.memory_space<vmem>>, vector<1x64xf32>
    %40 = vector.broadcast %38 : vector<1x64xf32> to vector<8x64xf32>
    %41 = arith.mulf %32, %40 : vector<8x64xf32>
    %42 = vector.broadcast %39 : vector<1x64xf32> to vector<8x64xf32>
    %43 = arith.mulf %37, %42 : vector<8x64xf32>
    %44 = arith.addf %41, %43 : vector<8x64xf32>
    %cst_22 = arith.constant dense<0.000000e+00> : vector<8xf32>
    %45 = vector.multi_reduction <add>, %44, %cst_22 [1] : vector<8x64xf32> to vector<8xf32>
    %46 = vector.shape_cast %45 : vector<8xf32> to vector<8x1xf32>
    %47 = vector.broadcast %27 : f32 to vector<8x1xf32>
    %48 = arith.addf %46, %47 : vector<8x1xf32>
    %c0_23 = arith.constant 0 : index
    %c1_24 = arith.constant 1 : index
    %49 = vector.load %arg5[%c0_23, %c1_24] : memref<8x2xf32, #tpu.memory_space<vmem>>, vector<8x1xf32>
    tpu.vector_store %arg5[%c0_23, %c1_24], %48 {strides = array<i32>} : memref<8x2xf32, #tpu.memory_space<vmem>>, vector<8x1xf32>,
    return
  }
  func.func @transform_0(%arg0: i32) -> i32 {
    %c0_i32 = arith.constant 0 : i32
    %c0_i32_0 = arith.constant 0 : i32
    return %c0_i32 : i32
  }
  func.func @transform_1(%arg0: i32) -> (i32, i32) {
    %c0_i32 = arith.constant 0 : i32
    %c0_i32_0 = arith.constant 0 : i32
    return %arg0, %c0_i32 : i32, i32
  }
  func.func @transform_2(%arg0: i32) -> (i32, i32) {
    %c0_i32 = arith.constant 0 : i32
    %c0_i32_0 = arith.constant 0 : i32
    return %arg0, %c0_i32 : i32, i32
  }
  func.func @transform_3(%arg0: i32) -> (i32, i32) {
    %c0_i32 = arith.constant 0 : i32
    %c0_i32_0 = arith.constant 0 : i32
    %c0_i32_1 = arith.constant 0 : i32
    return %c0_i32, %c0_i32_0 : i32, i32
  }
  func.func @transform_4(%arg0: i32) -> (i32, i32) {
    %c0_i32 = arith.constant 0 : i32
    %c0_i32_0 = arith.constant 0 : i32
    return %arg0, %c0_i32 : i32, i32
  }
}

</mosaic_0001>

<llo_original>
// kernel: qnet_forward_fused.1
$region0: #{qnet_forward_fused.1}
  #allocation0 [shape = 'u32[]', space=smem, size = 0x4, offset = 0x4, fixed_abs, tag = 'smem constant byte address 0x4 - core index']
  #allocation1 [shape = 'u32[72,128]{1,0:T(1,128)}', space=vmem, size = 0x9000, scoped, tag = 'internal scratch']
  %s0 = inlined_call_operand.vmem [shape: f32[6], index: 0, kind: input, shape index: {}]
  %s1 = inlined_call_operand.vmem [shape: f32[8,64], index: 1, kind: input, shape index: {}]
  %s2 = inlined_call_operand.vmem [shape: f32[8,64], index: 2, kind: input, shape index: {}]
  %s3 = inlined_call_operand.vmem [shape: f32[4,64], index: 3, kind: input, shape index: {}]
  %s4 = inlined_call_operand.vmem [shape: f32[8,2], index: 4, kind: output, shape index: {}]
  %s5 = sld [smem:[#allocation0]]
  $region30: #{qnet_forward_fused.1} parent=0
    _
  %s7 = ssub.s32 1, %s5
  %s8 = scalar_select 0, %s7, %s5
  $region1: #{qnet_forward_fused.1} parent=0
    #allocation2 [shape = 'u8[512]{0}', space=smem, size = 0x200, scoped, tag = 'input window, operand 0, single buffered']
    #allocation3 [shape = 's32[1]{0}', space=sflag, size = 0x4, scoped, tag = 'scoped memory for qnet_forward_fused.1']
    %9 = vsyncpa [#allocation3], 0
    // Predicated region
    $region2: #{qnet_forward_fused.1} parent=1 // pred_check
      _
    $region3: #{qnet_forward_fused.1} parent=1 // pred_check_branch
      %11 = sbr.rel (0) target = $region5
    $region4: #{qnet_forward_fused.1} parent=1 // pred_region
      %13 = vsyncadd [#allocation3], 0
      %s15 = sshll.u32 %s0, 4
      %s16 = int_to_ptr.vmem [resolvable:$true] %s15
      %18 = dma.vmem_to_smem %s16, 16, [#allocation2], [#allocation3]
    $region5: #{qnet_forward_fused.1} parent=1 // pred_fallthru
      _
    // Predicated region
    $region6: #{qnet_forward_fused.1} parent=1 // pred_check
      _
    $region7: #{qnet_forward_fused.1} parent=1 // pred_check_branch
      %20 = sbr.rel (0) target = $region9
    $region8: #{qnet_forward_fused.1} parent=1 // pred_region
      _
    $region9: #{qnet_forward_fused.1} parent=1 // pred_fallthru
      _
    // Predicated region
    $region10: #{qnet_forward_fused.1} parent=1 // pred_check
      _
    $region11: #{qnet_forward_fused.1} parent=1 // pred_check_branch
      %22 = sbr.rel (0) target = $region13
    $region12: #{qnet_forward_fused.1} parent=1 // pred_region
      _
    $region13: #{qnet_forward_fused.1} parent=1 // pred_fallthru
      _
    // Predicated region
    $region14: #{qnet_forward_fused.1} parent=1 // pred_check
      _
    $region15: #{qnet_forward_fused.1} parent=1 // pred_check_branch
      %24 = sbr.rel (0) target = $region17
    $region16: #{qnet_forward_fused.1} parent=1 // pred_region
      _
    $region17: #{qnet_forward_fused.1} parent=1 // pred_fallthru
      _
    // Predicated region
    $region18: #{qnet_forward_fused.1} parent=1 // pred_check
      _
    $region19: #{qnet_forward_fused.1} parent=1 // pred_check_branch
      %26 = sbr.rel (0) target = $region21
    $region20: #{qnet_forward_fused.1} parent=1 // pred_region
      %28 = dma.done [#allocation3], 16
    $region21: #{qnet_forward_fused.1} parent=1 // pred_fallthru
      _
    %29 = sfence
    %s30 = sld [smem:[#allocation2]]
    %s31 = sld [smem:[#allocation2 + $0x1]]
    %s32 = sld [smem:[#allocation2 + $0x2]]
    %v33 = vld [vmem:[%s1] sm:$0xff]
    %v34 = vstv %s30
    %v35 = vmul.f32 %v34, %v33
    %v36 = vmax.f32 %v35, 0.0
    %v37 = vld [vmem:[%s2] sm:$0xff]
    %v38 = vstv %s31
    %v39 = vmul.f32 %v38, %v37
    %v40 = vmax.f32 %v39, 0.0
    %v41 = vld [vmem:[%s3] sm:$0x1]
    %v42 = vld [vmem:[%s3 + $0x1] sm:$0x1]
    %v43 = vperm.slane %v41, 0
    %v44 = vmul.f32 %v36, %v43
    %v45 = vperm.slane %v42, 0
    %v46 = vmul.f32 %v40, %v45
    %v47 = vadd.f32 %v44, %v46
    %vm48 = vcmask 523264
    %v49 = vsel %vm48, %v47, 0.0
    %50 = vadd.xlane.f32.xlu0 %v49
    %v51 = vpop.xlane.xlu0 %50
    %v52 = vstv %s32
    %v53 = vadd.f32 %v51, %v52
    %vm54 = vcmask 7168
    %55 = vst.msk [vmem:[%s4] sm:$0xff] %vm54, %v53
    %s56 = sld [smem:[#allocation2 + $0x3]]
    %s57 = sld [smem:[#allocation2 + $0x4]]
    %s58 = sld [smem:[#allocation2 + $0x5]]
    %v59 = vld [vmem:[%s1] sm:$0xff]
    %v60 = vstv %s56
    %v61 = vmul.f32 %v60, %v59
    %v62 = vmax.f32 %v61, 0.0
    %v63 = vld [vmem:[%s2] sm:$0xff]
    %v64 = vstv %s57
    %v65 = vmul.f32 %v64, %v63
    %v66 = vmax.f32 %v65, 0.0
    %v67 = vld [vmem:[%s3 + $0x2] sm:$0x1]
    %v68 = vld [vmem:[%s3 + $0x3] sm:$0x1]
    %v69 = vperm.slane %v67, 0
    %v70 = vmul.f32 %v62, %v69
    %v71 = vperm.slane %v68, 0
    %v72 = vmul.f32 %v66, %v71
    %v73 = vadd.f32 %v70, %v72
    %v74 = vsel %vm48, %v73, 0.0
    %75 = vadd.xlane.f32.xlu0 %v74
    %v76 = vpop.xlane.xlu0 %75
    %v77 = vstv %s58
    %v78 = vadd.f32 %v76, %v77
    %vm79 = vcmask 15368
    %80 = vst.msk [vmem:[%s4] sm:$0xff] %vm79, %v78
    // Predicated region
    $region22: #{qnet_forward_fused.1} parent=1 // pred_check
      _
    $region23: #{qnet_forward_fused.1} parent=1 // pred_check_branch
      %82 = sbr.rel (0) target = $region25
    $region24: #{qnet_forward_fused.1} parent=1 // pred_region
      _
    $region25: #{qnet_forward_fused.1} parent=1 // pred_fallthru
      _
    // Predicated region
    $region26: #{qnet_forward_fused.1} parent=1 // pred_check
      _
    $region27: #{qnet_forward_fused.1} parent=1 // pred_check_branch
      %84 = sbr.rel (0) target = $region29
    $region28: #{qnet_forward_fused.1} parent=1 // pred_region
      _
    $region29: #{qnet_forward_fused.1} parent=1 // pred_fallthru
      _
    %85 = vsyncpa [#allocation3], 1

</llo_original>
